<compile_context>
chip_gen: v5e
topology: v5e:2x2
jax: 0.10.0
libtpu: 0.0.40
codegen_flags: <defaults>
</compile_context>

<pallas_src>
import jax
import jax.numpy as jnp
from jax.experimental import pallas as pl
from jax.experimental.pallas import tpu as pltpu


def _optical_kernel(x_ref, w_ref, o_ref):
    # x_ref: (TB, D)   w_ref: (1, D)   o_ref: (TB, D)
    w = w_ref[...]                                   # (1, D) — broadcast over sublanes
    # Write the product directly into the output tile (reuse it as scratch).
    o_ref[...] = x_ref[...] * w
    xm = o_ref[...]                                  # re-read; ld/st slots have slack here
    sq_sum = jnp.sum(xm * xm, axis=1, keepdims=True)  # (TB, 1) per-row sum of squares
    denom = jnp.sqrt(sq_sum) + 1e-4                  # (TB, 1)
    inv = pl.reciprocal(denom, approx=True)          # EUP reciprocal (off the VPU)
    inv = inv * (2.0 - denom * inv)                  # one Newton step -> ~f32-exact
    o_ref[...] = xm * inv                            # lane-dense stores, in-place scale


def _round_up(n, m):
    return ((n + m - 1) // m) * m


def _vmem_budget_bytes():
    """~75% of physical VMEM per core; conservative 48 MiB fallback (v7x-safe)."""
    try:
        cap = int(pltpu.get_tpu_info().vmem_capacity_bytes)
        if cap >= 32 * 1024 * 1024:
            return min(cap * 3 // 4, 96 * 1024 * 1024)
    except Exception:
        pass
    return 48 * 1024 * 1024


def _choose_tb(B, D, budget_bytes):
    """Rows per grid step, multiple of 8, sized to the VMEM budget."""
    # Per-row cost: 2x input + 2x output buffers (double-buffered pipeline)
    # plus headroom for elementwise temps and the weight row  ->  ~5 * 4B * D.
    bytes_per_row = 5 * 4 * D
    tb = max(8, (budget_bytes // bytes_per_row) // 8 * 8)
    b8 = _round_up(B, 8)
    if tb >= b8:
        if b8 >= 16:
            # Whole batch fits in one tile: split into two so v7x's two
            # TensorCores both get work (harmless on v5e/v6e).
            tb = _round_up((b8 + 1) // 2, 8)
        else:
            tb = b8
    return tb


def optical_layer(x, weight1):
    """x: (B, C, 30, 30) float32, weight1: (30, 30) float32 -> (B, C*30*30)."""
    B, C, H, W = x.shape
    assert (H, W) == weight1.shape, "weight must broadcast over the last two dims"
    D = C * H * W

    # Flatten to lane-dense layout in the wrapper; pre-tile the weight once so
    # the (30,30) broadcast over channels becomes a single (1, D) row.
    xf = x.reshape(B, D).astype(jnp.float32)
    wf = jnp.tile(weight1.reshape(1, H * W).astype(jnp.float32), (1, C))  # (1, D)

    budget = _vmem_budget_bytes()
    TB = _choose_tb(B, D, budget)
    n_tiles = -(-B // TB)
    Bp = n_tiles * TB
    if Bp != B:
        # Zero rows normalize to zero (0 / (0 + 1e-4) = 0), so padding never
        # contaminates real rows; it is sliced off after the call.
        xf = jnp.pad(xf, ((0, Bp - B), (0, 0)))

    cost = pl.CostEstimate(
        flops=4 * Bp * D,            # mul + square + reduce-add + scale
        transcendentals=2 * Bp,      # sqrt + reciprocal per row
        bytes_accessed=2 * Bp * D * 4 + D * 4,
    )

    out = pl.pallas_call(
        _optical_kernel,
        out_shape=jax.ShapeDtypeStruct((Bp, D), jnp.float32),
        grid_spec=pltpu.PrefetchScalarGridSpec(
            num_scalar_prefetch=0,
            grid=(n_tiles,),
            in_specs=[
                pl.BlockSpec((TB, D), lambda i: (i, 0)),
                pl.BlockSpec((1, D), lambda i: (0, 0)),
            ],
            out_specs=pl.BlockSpec((TB, D), lambda i: (i, 0)),
        ),
        compiler_params=pltpu.CompilerParams(
            dimension_semantics=("parallel",),
            vmem_limit_bytes=budget,
        ),
        cost_estimate=cost,
    )(xf, wf)

    if Bp != B:
        out = out[:B]
    return out


def optical_layer_ref(x, weight1):
    """Pure-JAX reference mirroring the PyTorch forward exactly."""
    B = x.shape[0]
    xm = x * weight1[None, None, :, :]
    xf = xm.reshape(B, -1)
    norm = jnp.sqrt(jnp.sum(xf * xf, axis=1, keepdims=True))
    return xf / (norm + 1e-4)


if __name__ == "__main__":
    key = jax.random.PRNGKey(0)
    k_x, k_w = jax.random.split(key)

    B, C, H, W = 2, 4, 30, 30  # H, W fixed at 30 by the (30, 30) weight in the module
    x = jax.random.normal(k_x, (B, C, H, W), dtype=jnp.float32)
    # nn.init.uniform_(weight1, a=0, b=1), deterministic synthetic init
    weight1 = jax.random.uniform(k_w, (H, W), dtype=jnp.float32, minval=0.0, maxval=1.0)

    y = optical_layer(x, weight1)
    y = jax.block_until_ready(y)

    y_ref = optical_layer_ref(x, weight1)
    assert y.shape == (B, C * H * W)
    assert jnp.allclose(y, y_ref, atol=1e-5, rtol=1e-5), "mismatch vs reference"

    print("KERNEL_OK")
</pallas_src>

<mosaic_0001>
module attributes {stable_mosaic.version = 11 : i64} {
  func.func @_optical_kernel(%arg0: i32, %arg1: memref<8x3600xf32, #tpu.memory_space<vmem>>, %arg2: memref<1x3600xf32, #tpu.memory_space<vmem>>, %arg3: memref<8x3600xf32, #tpu.memory_space<vmem>>) attributes {dimension_semantics = [#tpu.dimension_semantics<parallel>], iteration_bounds = array<i64: 1>, scalar_prefetch = 0 : i64, scratch_operands = 0 : i64, tpu.core_type = #tpu.core_type<tc>, window_params = [{transform_indices = @transform_0, window_bounds = array<i64: 8, 3600>}, {pipeline_mode = #tpu.pipeline_mode<synchronous>, transform_indices = @transform_1, window_bounds = array<i64: 1, 3600>}, {transform_indices = @transform_2, window_bounds = array<i64: 8, 3600>}]} {
    %c0 = arith.constant 0 : index
    %c0_0 = arith.constant 0 : index
    %0 = vector.load %arg2[%c0, %c0_0] : memref<1x3600xf32, #tpu.memory_space<vmem>>, vector<1x3600xf32>
    %c0_1 = arith.constant 0 : index
    %c0_2 = arith.constant 0 : index
    %1 = vector.load %arg1[%c0_1, %c0_2] : memref<8x3600xf32, #tpu.memory_space<vmem>>, vector<8x3600xf32>
    %2 = vector.broadcast %0 : vector<1x3600xf32> to vector<8x3600xf32>
    %3 = arith.mulf %1, %2 : vector<8x3600xf32>
    %c0_3 = arith.constant 0 : index
    %c0_4 = arith.constant 0 : index
    %4 = vector.load %arg3[%c0_3, %c0_4] : memref<8x3600xf32, #tpu.memory_space<vmem>>, vector<8x3600xf32>
    tpu.vector_store %arg3[%c0_3, %c0_4], %3 {strides = array<i32>} : memref<8x3600xf32, #tpu.memory_space<vmem>>, vector<8x3600xf32>,
    %c0_5 = arith.constant 0 : index
    %c0_6 = arith.constant 0 : index
    %5 = vector.load %arg3[%c0_5, %c0_6] : memref<8x3600xf32, #tpu.memory_space<vmem>>, vector<8x3600xf32>
    %6 = arith.mulf %5, %5 : vector<8x3600xf32>
    %cst = arith.constant dense<0.000000e+00> : vector<8xf32>
    %7 = vector.multi_reduction <add>, %6, %cst [1] : vector<8x3600xf32> to vector<8xf32>
    %8 = vector.shape_cast %7 : vector<8xf32> to vector<8x1xf32>
    %9 = math.sqrt %8 : vector<8x1xf32>
    %cst_7 = arith.constant 9.99999974E-5 : f32
    %10 = vector.broadcast %cst_7 : f32 to vector<8x1xf32>
    %11 = arith.addf %9, %10 : vector<8x1xf32>
    %12 = tpu.reciprocal %11 {approx = true} : vector<8x1xf32> -> vector<8x1xf32>
    %13 = arith.mulf %11, %12 : vector<8x1xf32>
    %cst_8 = arith.constant 2.000000e+00 : f32
    %14 = vector.broadcast %cst_8 : f32 to vector<8x1xf32>
    %15 = arith.subf %14, %13 : vector<8x1xf32>
    %16 = arith.mulf %12, %15 : vector<8x1xf32>
    %17 = vector.broadcast %16 : vector<8x1xf32> to vector<8x3600xf32>
    %18 = arith.mulf %5, %17 : vector<8x3600xf32>
    %c0_9 = arith.constant 0 : index
    %c0_10 = arith.constant 0 : index
    %19 = vector.load %arg3[%c0_9, %c0_10] : memref<8x3600xf32, #tpu.memory_space<vmem>>, vector<8x3600xf32>
    tpu.vector_store %arg3[%c0_9, %c0_10], %18 {strides = array<i32>} : memref<8x3600xf32, #tpu.memory_space<vmem>>, vector<8x3600xf32>,
    return
  }
  func.func @transform_0(%arg0: i32) -> (i32, i32) {
    %c0_i32 = arith.constant 0 : i32
    %c0_i32_0 = arith.constant 0 : i32
    return %arg0, %c0_i32 : i32, i32
  }
  func.func @transform_1(%arg0: i32) -> (i32, i32) {
    %c0_i32 = arith.constant 0 : i32
    %c0_i32_0 = arith.constant 0 : i32
    %c0_i32_1 = arith.constant 0 : i32
    return %c0_i32, %c0_i32_0 : i32, i32
  }
  func.func @transform_2(%arg0: i32) -> (i32, i32) {
    %c0_i32 = arith.constant 0 : i32
    %c0_i32_0 = arith.constant 0 : i32
    return %arg0, %c0_i32 : i32, i32
  }
}

</mosaic_0001>

<llo_original>
// kernel: tpu_custom_call.1
$region0: #{tpu_custom_call.1}
  #allocation0 [shape = 'u32[]', space=smem, size = 0x4, offset = 0x4, fixed_abs, tag = 'smem constant byte address 0x4 - core index']
  #allocation1 [shape = 'u32[72,128]{1,0:T(1,128)}', space=vmem, size = 0x9000, scoped, tag = 'internal scratch']
  %s0 = inlined_call_operand.hbm [shape: f32[8,3600], index: 0, kind: input, shape index: {}]
  %s1 = inlined_call_operand.hbm [shape: f32[1,3600], index: 1, kind: input, shape index: {}]
  %s2 = inlined_call_operand.hbm [shape: f32[8,3600], index: 2, kind: output, shape index: {}]
  %s3 = sld [smem:[#allocation0]]
  $region26: #{tpu_custom_call.1} parent=0
    _
  %s5 = ssub.s32 1, %s3
  %s6 = scalar_select 0, %s5, %s3
  $region1: #{tpu_custom_call.1} parent=0
    #allocation2 [shape = 'u8[118784]{0}', space=vmem, size = 0x1d000, scoped, tag = 'input window, operand 0, single buffered']
    #allocation3 [shape = 's32[1]{0}', space=sflag, size = 0x4, scoped, tag = 'scoped memory for tpu_custom_call.1']
    #allocation4 [shape = 's32[1]{0}', space=sflag, size = 0x4, scoped, tag = 'scoped memory for tpu_custom_call.1']
    #allocation5 [shape = 'u8[14848]{0}', space=vmem, size = 0x3c00, scoped, tag = 'input window, operand 1, single buffered']
    #allocation6 [shape = 's32[1]{0}', space=sflag, size = 0x4, scoped, tag = 'scoped memory for tpu_custom_call.1']
    #allocation7 [shape = 'u8[118784]{0}', space=vmem, size = 0x1d000, scoped, tag = 'output window, operand 0, single buffered']
    %7 = vsyncpa [#allocation3], 0
    %8 = vsyncpa [#allocation6], 0
    %9 = vsyncpa [#allocation4], 0
    // Predicated region
    $region2: #{tpu_custom_call.1} parent=1 // pred_check
      _
    $region3: #{tpu_custom_call.1} parent=1 // pred_check_branch
      %11 = sbr.rel (0) target = $region5
    $region4: #{tpu_custom_call.1} parent=1 // pred_region
      %13 = vsyncadd [#allocation3], 0
      %s15 = sshll.u32 %s0, 4
      %s16 = int_to_ptr.hbm [resolvable:$true] %s15
      %s17 = sshll.u32 [#allocation2], 4
      %s18 = int_to_ptr.vmem [resolvable:$true] %s17
      %20 = dma.hbm_to_vmem [thread:$0]  %s16, 3712, %s18, [#allocation3]
    $region5: #{tpu_custom_call.1} parent=1 // pred_fallthru
      _
    // Predicated region
    $region6: #{tpu_custom_call.1} parent=1 // pred_check
      _
    $region7: #{tpu_custom_call.1} parent=1 // pred_check_branch
      %22 = sbr.rel (0) target = $region9
    $region8: #{tpu_custom_call.1} parent=1 // pred_region
      %24 = vsyncadd [#allocation6], 0
      %s26 = sshll.u32 %s1, 4
      %s27 = int_to_ptr.hbm [resolvable:$true] %s26
      %s28 = sshll.u32 [#allocation5], 4
      %s29 = int_to_ptr.vmem [resolvable:$true] %s28
      %31 = dma.hbm_to_vmem [thread:$0]  %s27, 464, %s29, [#allocation6]
    $region9: #{tpu_custom_call.1} parent=1 // pred_fallthru
      _
    // Predicated region
    $region10: #{tpu_custom_call.1} parent=1 // pred_check
      _
    $region11: #{tpu_custom_call.1} parent=1 // pred_check_branch
      %33 = sbr.rel (0) target = $region13
    $region12: #{tpu_custom_call.1} parent=1 // pred_region
      %35 = dma.done [#allocation3], 3712
    $region13: #{tpu_custom_call.1} parent=1 // pred_fallthru
      _
    // Predicated region
    $region14: #{tpu_custom_call.1} parent=1 // pred_check
      _
    $region15: #{tpu_custom_call.1} parent=1 // pred_check_branch
      %37 = sbr.rel (0) target = $region17
    $region16: #{tpu_custom_call.1} parent=1 // pred_region
      %39 = dma.done [#allocation6], 464
    $region17: #{tpu_custom_call.1} parent=1 // pred_fallthru
      _
    %v40 = vld [vmem:[#allocation5] sm:$0xff]
    %v41 = vld [vmem:[#allocation5 + $0x8] sm:$0xff]
    %v42 = vld [vmem:[#allocation5 + $0x10] sm:$0xff]
    %v43 = vld [vmem:[#allocation5 + $0x18] sm:$0x1f]
    %v44 = vld [vmem:[#allocation2] sm:$0xff]
    %v45 = vld [vmem:[#allocation2 + $0x8] sm:$0xff]
    %v46 = vld [vmem:[#allocation2 + $0x10] sm:$0xff]
    %v47 = vld [vmem:[#allocation2 + $0x18] sm:$0xff]
    %v48 = vld [vmem:[#allocation2 + $0x20] sm:$0xff]
    %v49 = vld [vmem:[#allocation2 + $0x28] sm:$0xff]
    %v50 = vld [vmem:[#allocation2 + $0x30] sm:$0xff]
    %v51 = vld [vmem:[#allocation2 + $0x38] sm:$0xff]
    %v52 = vld [vmem:[#allocation2 + $0x40] sm:$0xff]
    %v53 = vld [vmem:[#allocation2 + $0x48] sm:$0xff]
    %v54 = vld [vmem:[#allocation2 + $0x50] sm:$0xff]
    %v55 = vld [vmem:[#allocation2 + $0x58] sm:$0xff]
    %v56 = vld [vmem:[#allocation2 + $0x60] sm:$0xff]
    %v57 = vld [vmem:[#allocation2 + $0x68] sm:$0xff]
    %v58 = vld [vmem:[#allocation2 + $0x70] sm:$0xff]
    %v59 = vld [vmem:[#allocation2 + $0x78] sm:$0xff]
    %v60 = vld [vmem:[#allocation2 + $0x80] sm:$0xff]
    %v61 = vld [vmem:[#allocation2 + $0x88] sm:$0xff]
    %v62 = vld [vmem:[#allocation2 + $0x90] sm:$0xff]
    %v63 = vld [vmem:[#allocation2 + $0x98] sm:$0xff]
    %v64 = vld [vmem:[#allocation2 + $0xa0] sm:$0xff]
    %v65 = vld [vmem:[#allocation2 + $0xa8] sm:$0xff]
    %v66 = vld [vmem:[#allocation2 + $0xb0] sm:$0xff]
    %v67 = vld [vmem:[#allocation2 + $0xb8] sm:$0xff]
    %v68 = vld [vmem:[#allocation2 + $0xc0] sm:$0xff]
    %v69 = vld [vmem:[#allocation2 + $0xc8] sm:$0xff]
    %v70 = vld [vmem:[#allocation2 + $0xd0] sm:$0xff]
    %v71 = vld [vmem:[#allocation2 + $0xd8] sm:$0xff]
    %v72 = vld [vmem:[#allocation2 + $0xe0] sm:$0xff]
    %v77 = vperm.slane %v40, 0
    %v78 = vperm.slane %v40, 1
    %v79 = vperm.slane %v40, 2
    %v80 = vperm.slane %v40, 3
    %v81 = vperm.slane %v40, 4
    %v82 = vperm.slane %v40, 5
    %v83 = vperm.slane %v40, 6
    %v84 = vperm.slane %v40, 7
    %v85 = vperm.slane %v41, 0
    %v86 = vperm.slane %v41, 1
    %v87 = vperm.slane %v41, 2
    %v88 = vperm.slane %v41, 3
    %v89 = vperm.slane %v41, 4
    %v90 = vperm.slane %v41, 5
    %v91 = vperm.slane %v41, 6
    %v92 = vperm.slane %v41, 7
    %v93 = vperm.slane %v42, 0
    %v94 = vperm.slane %v42, 1
    %v95 = vperm.slane %v42, 2
    %v96 = vperm.slane %v42, 3
    %v97 = vperm.slane %v42, 4
    %v98 = vperm.slane %v42, 5
    %v99 = vperm.slane %v42, 6
    %v100 = vperm.slane %v42, 7
    %v101 = vperm.slane %v43, 0
    %v102 = vperm.slane %v43, 1
    %v103 = vperm.slane %v43, 2
    %v104 = vperm.slane %v43, 3
    %v105 = vperm.slane %v43, 4
    %v135 = vmul.f32 %v44, %v77
    %v136 = vmul.f32 %v45, %v78
    %v137 = vmul.f32 %v46, %v79
    %v138 = vmul.f32 %v47, %v80
    %v139 = vmul.f32 %v48, %v81
    %v140 = vmul.f32 %v49, %v82
    %v141 = vmul.f32 %v50, %v83
    %v142 = vmul.f32 %v51, %v84
    %v143 = vmul.f32 %v52, %v85
    %v144 = vmul.f32 %v53, %v86
    %v145 = vmul.f32 %v54, %v87
    %v146 = vmul.f32 %v55, %v88
    %v147 = vmul.f32 %v56, %v89
    %v148 = vmul.f32 %v57, %v90
    %v149 = vmul.f32 %v58, %v91
    %v150 = vmul.f32 %v59, %v92
    %v151 = vmul.f32 %v60, %v93
    %v152 = vmul.f32 %v61, %v94
    %v153 = vmul.f32 %v62, %v95
    %v154 = vmul.f32 %v63, %v96
    %v155 = vmul.f32 %v64, %v97
    %v156 = vmul.f32 %v65, %v98
    %v157 = vmul.f32 %v66, %v99
    %v158 = vmul.f32 %v67, %v100
    %v159 = vmul.f32 %v68, %v101
    %v160 = vmul.f32 %v69, %v102
    %v161 = vmul.f32 %v70, %v103
    %v162 = vmul.f32 %v71, %v104
    %v163 = vmul.f32 %v72, %v105
    %164 = vst [vmem:[#allocation7] sm:$0xff] %v135
    %165 = vst [vmem:[#allocation7 + $0x8] sm:$0xff] %v136
    %166 = vst [vmem:[#allocation7 + $0x10] sm:$0xff] %v137
    %167 = vst [vmem:[#allocation7 + $0x18] sm:$0xff] %v138
    %168 = vst [vmem:[#allocation7 + $0x20] sm:$0xff] %v139
    %169 = vst [vmem:[#allocation7 + $0x28] sm:$0xff] %v140
    %170 = vst [vmem:[#allocation7 + $0x30] sm:$0xff] %v141
    %171 = vst [vmem:[#allocation7 + $0x38] sm:$0xff] %v142
    %172 = vst [vmem:[#allocation7 + $0x40] sm:$0xff] %v143
    %173 = vst [vmem:[#allocation7 + $0x48] sm:$0xff] %v144
    %174 = vst [vmem:[#allocation7 + $0x50] sm:$0xff] %v145
    %175 = vst [vmem:[#allocation7 + $0x58] sm:$0xff] %v146
    %176 = vst [vmem:[#allocation7 + $0x60] sm:$0xff] %v147
    %177 = vst [vmem:[#allocation7 + $0x68] sm:$0xff] %v148
    %178 = vst [vmem:[#allocation7 + $0x70] sm:$0xff] %v149
    %179 = vst [vmem:[#allocation7 + $0x78] sm:$0xff] %v150
    %180 = vst [vmem:[#allocation7 + $0x80] sm:$0xff] %v151
    %181 = vst [vmem:[#allocation7 + $0x88] sm:$0xff] %v152
    %182 = vst [vmem:[#allocation7 + $0x90] sm:$0xff] %v153
    %183 = vst [vmem:[#allocation7 + $0x98] sm:$0xff] %v154
    %184 = vst [vmem:[#allocation7 + $0xa0] sm:$0xff] %v155
    %185 = vst [vmem:[#allocation7 + $0xa8] sm:$0xff] %v156
    %186 = vst [vmem:[#allocation7 + $0xb0] sm:$0xff] %v157
    %187 = vst [vmem:[#allocation7 + $0xb8] sm:$0xff] %v158
    %188 = vst [vmem:[#allocation7 + $0xc0] sm:$0xff] %v159
    %189 = vst [vmem:[#allocation7 + $0xc8] sm:$0xff] %v160
    %190 = vst [vmem:[#allocation7 + $0xd0] sm:$0xff] %v161
    %191 = vst [vmem:[#allocation7 + $0xd8] sm:$0xff] %v162
    %vm192 = vcmask 130048
    %193 = vst.msk [vmem:[#allocation7 + $0xe0] sm:$0xff] %vm192, %v163
    %v194 = vld [vmem:[#allocation7] sm:$0xff]
    %v195 = vld [vmem:[#allocation7 + $0x8] sm:$0xff]
    %v196 = vld [vmem:[#allocation7 + $0x10] sm:$0xff]
    %v197 = vld [vmem:[#allocation7 + $0x18] sm:$0xff]
    %v198 = vld [vmem:[#allocation7 + $0x20] sm:$0xff]
    %v199 = vld [vmem:[#allocation7 + $0x28] sm:$0xff]
    %v200 = vld [vmem:[#allocation7 + $0x30] sm:$0xff]
    %v201 = vld [vmem:[#allocation7 + $0x38] sm:$0xff]
    %v202 = vld [vmem:[#allocation7 + $0x40] sm:$0xff]
    %v203 = vld [vmem:[#allocation7 + $0x48] sm:$0xff]
    %v204 = vld [vmem:[#allocation7 + $0x50] sm:$0xff]
    %v205 = vld [vmem:[#allocation7 + $0x58] sm:$0xff]
    %v206 = vld [vmem:[#allocation7 + $0x60] sm:$0xff]
    %v207 = vld [vmem:[#allocation7 + $0x68] sm:$0xff]
    %v208 = vld [vmem:[#allocation7 + $0x70] sm:$0xff]
    %v209 = vld [vmem:[#allocation7 + $0x78] sm:$0xff]
    %v210 = vld [vmem:[#allocation7 + $0x80] sm:$0xff]
    %v211 = vld [vmem:[#allocation7 + $0x88] sm:$0xff]
    %v212 = vld [vmem:[#allocation7 + $0x90] sm:$0xff]
    %v213 = vld [vmem:[#allocation7 + $0x98] sm:$0xff]
    %v214 = vld [vmem:[#allocation7 + $0xa0] sm:$0xff]
    %v215 = vld [vmem:[#allocation7 + $0xa8] sm:$0xff]
    %v216 = vld [vmem:[#allocation7 + $0xb0] sm:$0xff]
    %v217 = vld [vmem:[#allocation7 + $0xb8] sm:$0xff]
    %v218 = vld [vmem:[#allocation7 + $0xc0] sm:$0xff]
    %v219 = vld [vmem:[#allocation7 + $0xc8] sm:$0xff]
    %v220 = vld [vmem:[#allocation7 + $0xd0] sm:$0xff]
    %v221 = vld [vmem:[#allocation7 + $0xd8] sm:$0xff]
    %v222 = vld [vmem:[#allocation7 + $0xe0] sm:$0xff]
    %v223 = vmul.f32 %v194, %v194
    %v224 = vmul.f32 %v195, %v195
    %v225 = vmul.f32 %v196, %v196
    %v226 = vmul.f32 %v197, %v197
    %v227 = vmul.f32 %v198, %v198
    %v228 = vmul.f32 %v199, %v199
    %v229 = vmul.f32 %v200, %v200
    %v230 = vmul.f32 %v201, %v201
    %v231 = vmul.f32 %v202, %v202
    %v232 = vmul.f32 %v203, %v203
    %v233 = vmul.f32 %v204, %v204
    %v234 = vmul.f32 %v205, %v205
    %v235 = vmul.f32 %v206, %v206
    %v236 = vmul.f32 %v207, %v207
    %v237 = vmul.f32 %v208, %v208
    %v238 = vmul.f32 %v209, %v209
    %v239 = vmul.f32 %v210, %v210
    %v240 = vmul.f32 %v211, %v211
    %v241 = vmul.f32 %v212, %v212
    %v242 = vmul.f32 %v213, %v213
    %v243 = vmul.f32 %v214, %v214
    %v244 = vmul.f32 %v215, %v215
    %v245 = vmul.f32 %v216, %v216
    %v246 = vmul.f32 %v217, %v217
    %v247 = vmul.f32 %v218, %v218
    %v248 = vmul.f32 %v219, %v219
    %v249 = vmul.f32 %v220, %v220
    %v250 = vmul.f32 %v221, %v221
    %v251 = vmul.f32 %v222, %v222
    %v252 = vadd.f32 %v223, %v224
    %v253 = vadd.f32 %v252, %v225
    %v254 = vadd.f32 %v253, %v226
    %v255 = vadd.f32 %v254, %v227
    %v256 = vadd.f32 %v255, %v228
    %v257 = vadd.f32 %v256, %v229
    %v258 = vadd.f32 %v257, %v230
    %v259 = vadd.f32 %v258, %v231
    %v260 = vadd.f32 %v259, %v232
    %v261 = vadd.f32 %v260, %v233
    %v262 = vadd.f32 %v261, %v234
    %v263 = vadd.f32 %v262, %v235
    %v264 = vadd.f32 %v263, %v236
    %v265 = vadd.f32 %v264, %v237
    %v266 = vadd.f32 %v265, %v238
    %v267 = vadd.f32 %v266, %v239
    %v268 = vadd.f32 %v267, %v240
    %v269 = vadd.f32 %v268, %v241
    %v270 = vadd.f32 %v269, %v242
    %v271 = vadd.f32 %v270, %v243
    %v272 = vadd.f32 %v271, %v244
    %v273 = vadd.f32 %v272, %v245
    %v274 = vadd.f32 %v273, %v246
    %v275 = vadd.f32 %v274, %v247
    %v276 = vadd.f32 %v275, %v248
    %v277 = vadd.f32 %v276, %v249
    %v278 = vadd.f32 %v277, %v250
    %v279 = vsel %vm192, %v251, 0.0
    %v280 = vadd.f32 %v278, %v279
    %281 = vadd.xlane.f32.xlu0 %v280
    %v282 = vpop.xlane.xlu0 %281
    %v283 = vrsqrt.pop %v282
    %v284 = vmul.f32 %v283, %v282
    %v285 = vmul.f32 %v284, %v283
    %v286 = vmul.f32 0.5, %v285
    %v287 = vsub.f32 1.5, %v286
    %v288 = vmul.f32 %v283, %v287
    %v289 = vmul.f32 %v282, %v288
    %vm290 = vcmp.eq.f32.partialorder %v282, inf
    %v291 = vsel %vm290, %v282, %v289
    %vm292 = vcmp.eq.f32.partialorder %v282, 0.0
    %v293 = vand.u32 %v282, 2147483648
    %v294 = vsel %vm292, %v293, %v291
    %v295 = vadd.f32 %v294, 0.0001
    %v296 = vrcp.pop %v295
    %v297 = vmul.f32 %v295, %v296
    %v298 = vsub.f32 2.0, %v297
    %v299 = vmul.f32 %v296, %v298
    %v300 = vmul.f32 %v194, %v299
    %v301 = vmul.f32 %v195, %v299
    %v302 = vmul.f32 %v196, %v299
    %v303 = vmul.f32 %v197, %v299
    %v304 = vmul.f32 %v198, %v299
    %v305 = vmul.f32 %v199, %v299
    %v306 = vmul.f32 %v200, %v299
    %v307 = vmul.f32 %v201, %v299
    %v308 = vmul.f32 %v202, %v299
    %v309 = vmul.f32 %v203, %v299
    %v310 = vmul.f32 %v204, %v299
    %v311 = vmul.f32 %v205, %v299
    %v312 = vmul.f32 %v206, %v299
    %v313 = vmul.f32 %v207, %v299
    %v314 = vmul.f32 %v208, %v299
    %v315 = vmul.f32 %v209, %v299
    %v316 = vmul.f32 %v210, %v299
    %v317 = vmul.f32 %v211, %v299
    %v318 = vmul.f32 %v212, %v299
    %v319 = vmul.f32 %v213, %v299
    %v320 = vmul.f32 %v214, %v299
    %v321 = vmul.f32 %v215, %v299
    %v322 = vmul.f32 %v216, %v299
    %v323 = vmul.f32 %v217, %v299
    %v324 = vmul.f32 %v218, %v299
    %v325 = vmul.f32 %v219, %v299
    %v326 = vmul.f32 %v220, %v299
    %v327 = vmul.f32 %v221, %v299
    %v328 = vmul.f32 %v222, %v299
    %329 = vst [vmem:[#allocation7] sm:$0xff] %v300
    %330 = vst [vmem:[#allocation7 + $0x8] sm:$0xff] %v301
    %331 = vst [vmem:[#allocation7 + $0x10] sm:$0xff] %v302
    %332 = vst [vmem:[#allocation7 + $0x18] sm:$0xff] %v303
    %333 = vst [vmem:[#allocation7 + $0x20] sm:$0xff] %v304
    %334 = vst [vmem:[#allocation7 + $0x28] sm:$0xff] %v305
    %335 = vst [vmem:[#allocation7 + $0x30] sm:$0xff] %v306
    %336 = vst [vmem:[#allocation7 + $0x38] sm:$0xff] %v307
    %337 = vst [vmem:[#allocation7 + $0x40] sm:$0xff] %v308
    %338 = vst [vmem:[#allocation7 + $0x48] sm:$0xff] %v309
    %339 = vst [vmem:[#allocation7 + $0x50] sm:$0xff] %v310
    %340 = vst [vmem:[#allocation7 + $0x58] sm:$0xff] %v311
    %341 = vst [vmem:[#allocation7 + $0x60] sm:$0xff] %v312
    %342 = vst [vmem:[#allocation7 + $0x68] sm:$0xff] %v313
    %343 = vst [vmem:[#allocation7 + $0x70] sm:$0xff] %v314
    %344 = vst [vmem:[#allocation7 + $0x78] sm:$0xff] %v315
    %345 = vst [vmem:[#allocation7 + $0x80] sm:$0xff] %v316
    %346 = vst [vmem:[#allocation7 + $0x88] sm:$0xff] %v317
    %347 = vst [vmem:[#allocation7 + $0x90] sm:$0xff] %v318
    %348 = vst [vmem:[#allocation7 + $0x98] sm:$0xff] %v319
    %349 = vst [vmem:[#allocation7 + $0xa0] sm:$0xff] %v320
    %350 = vst [vmem:[#allocation7 + $0xa8] sm:$0xff] %v321
    %351 = vst [vmem:[#allocation7 + $0xb0] sm:$0xff] %v322
    %352 = vst [vmem:[#allocation7 + $0xb8] sm:$0xff] %v323
    %353 = vst [vmem:[#allocation7 + $0xc0] sm:$0xff] %v324
    %354 = vst [vmem:[#allocation7 + $0xc8] sm:$0xff] %v325
    %355 = vst [vmem:[#allocation7 + $0xd0] sm:$0xff] %v326
    %356 = vst [vmem:[#allocation7 + $0xd8] sm:$0xff] %v327
    %357 = vst.msk [vmem:[#allocation7 + $0xe0] sm:$0xff] %vm192, %v328
    // Predicated region
    $region18: #{tpu_custom_call.1} parent=1 // pred_check
      _
    $region19: #{tpu_custom_call.1} parent=1 // pred_check_branch
      %359 = sbr.rel (0) target = $region21
    $region20: #{tpu_custom_call.1} parent=1 // pred_region
      %361 = vsyncadd [#allocation4], 0
      %s363 = sshll.u32 [#allocation7], 4
      %s364 = int_to_ptr.vmem [resolvable:$true] %s363
      %s365 = sshll.u32 %s2, 4
      %s366 = int_to_ptr.hbm [resolvable:$true] %s365
      %368 = dma.vmem_to_hbm [thread:$0]  %s364, 3712, %s366, [#allocation4]
    $region21: #{tpu_custom_call.1} parent=1 // pred_fallthru
      _
    // Predicated region
    $region22: #{tpu_custom_call.1} parent=1 // pred_check
      _
    $region23: #{tpu_custom_call.1} parent=1 // pred_check_branch
      %370 = sbr.rel (0) target = $region25
    $region24: #{tpu_custom_call.1} parent=1 // pred_region
      %372 = dma.done [#allocation4], 3712
    $region25: #{tpu_custom_call.1} parent=1 // pred_fallthru
      _
    %373 = vsyncpa [#allocation3], 1
    %374 = vsyncpa [#allocation6], 1
    %375 = vsyncpa [#allocation4], 1

</llo_original>
